<compile_context>
chip_gen: v5e
topology: v5e:2x2
jax: 0.10.0
libtpu: 0.0.40
codegen_flags: <defaults>
</compile_context>

<pallas_src>
import functools

import jax
import jax.numpy as jnp
from jax.experimental import pallas as pl
from jax.experimental.pallas import tpu as pltpu

KMIN, KMAX = 3, 5          # conv kernel sizes 3, 4, 5
PAD_T = KMAX - KMIN        # time padding so all 5 fused taps read in-bounds


def _round_up(x, m):
    return -(-x // m) * m


def _conv_sent_encoder_kernel(emb_ref, w_ref, b_ref, out_ref, *, L, H):
    """Fused conv(3,4,5) + max-over-time + bias + ReLU for one batch tile.

    emb_ref : [TB, L + PAD_T, D]  bf16   (time axis zero-padded by PAD_T)
    w_ref   : [KMAX, D, NP]       bf16   (fused, zero-padded conv weights)
    b_ref   : [1, NP]             f32    (fused, zero-padded biases)
    out_ref : [TB, NP]            f32    (lane-dense, NP multiple of 128)
    """
    lo = L - (KMIN - 1)                      # output length of the widest range (k=3)
    NP = out_ref.shape[1]
    dn = (((2,), (0,)), ((), ()))            # contract emb's D with weight's D

    # Conv1d as a sum of KMAX shifted matmuls on the MXU (f32 accumulation).
    acc = jax.lax.dot_general(
        emb_ref[:, 0:lo, :], w_ref[0], dimension_numbers=dn,
        preferred_element_type=jnp.float32)
    for j in range(1, KMAX):                 # tiny & static -> unrolled
        acc = acc + jax.lax.dot_general(
            emb_ref[:, j:j + lo, :], w_ref[j], dimension_numbers=dn,
            preferred_element_type=jnp.float32)

    # Mask time positions outside each conv's valid output range
    # (columns [0,H) -> k=3, [H,2H) -> k=4, [2H,3H) + padding -> k=5).
    t_idx = jax.lax.broadcasted_iota(jnp.int32, (lo, NP), 0)
    h_idx = jax.lax.broadcasted_iota(jnp.int32, (lo, NP), 1)
    ksz = jnp.where(h_idx < H, KMIN, jnp.where(h_idx < 2 * H, KMIN + 1, KMAX))
    valid = (t_idx + ksz) <= L
    acc = jnp.where(valid[None, :, :], acc, -jnp.inf)

    pooled = jnp.max(acc, axis=1)                              # [TB, NP]
    out_ref[...] = jnp.maximum(pooled + b_ref[...], 0.0)       # bias + ReLU post-pool


def conv_sent_encoder(ids, emb_table, params, *, batch_tile=64):
    """ids: [B, L] int32; emb_table: [V, D]; params: dict with w3/b3/w4/b4/w5/b5.

    w{k} has shape [k, D, H]  (w_pallas[j, d, h] == w_torch[h, d, j]),
    b{k} has shape [1, H].  Returns [B, 3*H] float32.
    """
    B, L = ids.shape
    D = emb_table.shape[1]
    H = params["w3"].shape[2]
    assert L >= KMAX, "sequence length must be >= largest conv kernel (5)"

    # Embedding lookup (padding_idx=0 handled by zeroed row 0 of the table).
    # TODO(synk): F.dropout(training=True) not implemented; inference mode only.
    # TODO(synk): embedding gather left to XLA; could be fused via pl.ANY table +
    #             in-kernel DMA row gather to avoid the HBM round trip of `emb`.
    emb = jnp.take(emb_table, ids, axis=0).astype(jnp.bfloat16)   # [B, L, D]
    # Zero-pad time axis so all KMAX fused taps read in-bounds.
    emb = jnp.pad(emb, ((0, 0), (0, PAD_T), (0, 0)))              # [B, L+PAD_T, D]

    # Batch tiling (tile must be a multiple of 8 or equal the padded batch).
    if B <= batch_tile:
        TB, Bp = B, B
    else:
        TB = batch_tile
        Bp = _round_up(B, TB)
        if Bp != B:
            emb = jnp.pad(emb, ((0, Bp - B), (0, 0), (0, 0)))

    # Fuse the three conv weights into one [KMAX, D, NP] slab (NP lane-aligned).
    NP = _round_up(3 * H, 128)
    w = jnp.zeros((KMAX, D, NP), jnp.float32)
    w = w.at[0:3, :, 0:H].set(params["w3"])
    w = w.at[0:4, :, H:2 * H].set(params["w4"])
    w = w.at[0:5, :, 2 * H:3 * H].set(params["w5"])
    w = w.astype(jnp.bfloat16)

    b = jnp.zeros((1, NP), jnp.float32)
    b = b.at[:, 0:H].set(params["b3"])
    b = b.at[:, H:2 * H].set(params["b4"])
    b = b.at[:, 2 * H:3 * H].set(params["b5"])

    Lp = L + PAD_T
    kernel = functools.partial(_conv_sent_encoder_kernel, L=L, H=H)

    out = pl.pallas_call(
        kernel,
        out_shape=jax.ShapeDtypeStruct((Bp, NP), jnp.float32),
        grid=(Bp // TB,),
        in_specs=[
            pl.BlockSpec((TB, Lp, D), lambda i: (i, 0, 0)),       # pipelined emb tiles
            pl.BlockSpec((KMAX, D, NP), lambda i: (0, 0, 0)),     # resident weights
            pl.BlockSpec((1, NP), lambda i: (0, 0)),              # resident bias
        ],
        out_specs=pl.BlockSpec((TB, NP), lambda i: (i, 0)),       # lane-dense store
        compiler_params=pltpu.CompilerParams(
            dimension_semantics=("parallel",)),
    )(emb, w, b)

    return out[:B, :3 * H]


def _reference(ids, emb_table, params):
    """Pure-JAX (f32) reference for correctness checking."""
    emb = jnp.take(emb_table, ids, axis=0).astype(jnp.float32)   # [B, L, D]
    outs = []
    for k, (w, b) in ((3, (params["w3"], params["b3"])),
                      (4, (params["w4"], params["b4"])),
                      (5, (params["w5"], params["b5"]))):
        lo = emb.shape[1] - k + 1
        acc = sum(jnp.einsum("bld,dh->blh", emb[:, j:j + lo, :], w[j])
                  for j in range(k)) + b[0]
        outs.append(jnp.max(jnp.maximum(acc, 0.0), axis=1))
    return jnp.concatenate(outs, axis=1)


def _init_params(key, vocab_size, emb_dim, n_hidden):
    keys = jax.random.split(key, 8)
    # Embedding table; padding_idx=0 row zeroed (as nn.Embedding(padding_idx=0)).
    emb_table = 0.1 * jax.random.normal(keys[0], (vocab_size, emb_dim), jnp.float32)
    emb_table = emb_table.at[0].set(0.0)
    params = {}
    for i, k in enumerate((3, 4, 5)):
        # Conv1d(emb_dim, n_hidden, k): torch weight [H, D, k] -> stored as [k, D, H].
        params[f"w{k}"] = 0.1 * jax.random.normal(
            keys[1 + 2 * i], (k, emb_dim, n_hidden), jnp.float32)
        params[f"b{k}"] = 0.1 * jax.random.normal(
            keys[2 + 2 * i], (1, n_hidden), jnp.float32)
    return emb_table, params


if __name__ == "__main__":
    key = jax.random.PRNGKey(0)
    vocab_size, emb_dim, n_hidden = 100, 32, 32
    batch, seq_len = 2, 16

    k_ids, k_params = jax.random.split(key)
    ids = jax.random.randint(k_ids, (batch, seq_len), 0, vocab_size, dtype=jnp.int32)
    emb_table, params = _init_params(k_params, vocab_size, emb_dim, n_hidden)

    out = conv_sent_encoder(ids, emb_table, params)
    out = jax.block_until_ready(out)

    ref = _reference(ids, emb_table, params)
    assert out.shape == (batch, 3 * n_hidden), out.shape
    # bf16 matmul inputs vs f32 reference -> loosened tolerance.
    assert jnp.allclose(out, ref, atol=2e-2, rtol=2e-2), "mismatch vs reference"
    print("KERNEL_OK")
</pallas_src>

<mosaic_0001>
module attributes {stable_mosaic.version = 11 : i64} {
  func.func @_conv_sent_encoder_kernel(%arg0: i32, %arg1: memref<2x18x32xbf16, #tpu.memory_space<vmem>>, %arg2: memref<5x32x128xbf16, #tpu.memory_space<vmem>>, %arg3: memref<1x128xf32, #tpu.memory_space<vmem>>, %arg4: memref<2x128xf32, #tpu.memory_space<vmem>>) attributes {dimension_semantics = [#tpu.dimension_semantics<parallel>], iteration_bounds = array<i64: 1>, scalar_prefetch = 0 : i64, scratch_operands = 0 : i64, tpu.core_type = #tpu.core_type<tc>, window_params = [{transform_indices = @transform_0, window_bounds = array<i64: 2, 18, 32>}, {pipeline_mode = #tpu.pipeline_mode<synchronous>, transform_indices = @transform_1, window_bounds = array<i64: 5, 32, 128>}, {pipeline_mode = #tpu.pipeline_mode<synchronous>, transform_indices = @transform_2, window_bounds = array<i64: 1, 128>}, {transform_indices = @transform_3, window_bounds = array<i64: 2, 128>}]} {
    %c0 = arith.constant 0 : index
    %c0_0 = arith.constant 0 : index
    %c0_1 = arith.constant 0 : index
    %0 = vector.load %arg1[%c0, %c0_0, %c0_1] : memref<2x18x32xbf16, #tpu.memory_space<vmem>>, vector<2x14x32xbf16>
    %c0_2 = arith.constant 0 : index
    %c0_3 = arith.constant 0 : index
    %c0_4 = arith.constant 0 : index
    %1 = vector.load %arg2[%c0_2, %c0_3, %c0_4] : memref<5x32x128xbf16, #tpu.memory_space<vmem>>, vector<1x32x128xbf16>
    %2 = vector.shape_cast %1 : vector<1x32x128xbf16> to vector<32x128xbf16>
    %cst = arith.constant dense<0.000000e+00> : vector<2x14x128xf32>
    %3 = tpu.matmul %0, %2, %cst {dimension_numbers = #tpu.dot_dimension_numbers<[2], [0], [0, 1], [1], [0, 0, 0, 1, 1, 1], [], []>} : vector<2x14x32xbf16>, vector<32x128xbf16>, vector<2x14x128xf32> -> vector<2x14x128xf32>
    %c0_5 = arith.constant 0 : index
    %c1 = arith.constant 1 : index
    %c0_6 = arith.constant 0 : index
    %4 = vector.load %arg1[%c0_5, %c1, %c0_6] : memref<2x18x32xbf16, #tpu.memory_space<vmem>>, vector<2x14x32xbf16>
    %c1_7 = arith.constant 1 : index
    %c0_8 = arith.constant 0 : index
    %c0_9 = arith.constant 0 : index
    %5 = vector.load %arg2[%c1_7, %c0_8, %c0_9] : memref<5x32x128xbf16, #tpu.memory_space<vmem>>, vector<1x32x128xbf16>
    %6 = vector.shape_cast %5 : vector<1x32x128xbf16> to vector<32x128xbf16>
    %cst_10 = arith.constant dense<0.000000e+00> : vector<2x14x128xf32>
    %7 = tpu.matmul %4, %6, %cst_10 {dimension_numbers = #tpu.dot_dimension_numbers<[2], [0], [0, 1], [1], [0, 0, 0, 1, 1, 1], [], []>} : vector<2x14x32xbf16>, vector<32x128xbf16>, vector<2x14x128xf32> -> vector<2x14x128xf32>
    %8 = arith.addf %3, %7 : vector<2x14x128xf32>
    %c0_11 = arith.constant 0 : index
    %c2 = arith.constant 2 : index
    %c0_12 = arith.constant 0 : index
    %9 = vector.load %arg1[%c0_11, %c2, %c0_12] : memref<2x18x32xbf16, #tpu.memory_space<vmem>>, vector<2x14x32xbf16>
    %c2_13 = arith.constant 2 : index
    %c0_14 = arith.constant 0 : index
    %c0_15 = arith.constant 0 : index
    %10 = vector.load %arg2[%c2_13, %c0_14, %c0_15] : memref<5x32x128xbf16, #tpu.memory_space<vmem>>, vector<1x32x128xbf16>
    %11 = vector.shape_cast %10 : vector<1x32x128xbf16> to vector<32x128xbf16>
    %cst_16 = arith.constant dense<0.000000e+00> : vector<2x14x128xf32>
    %12 = tpu.matmul %9, %11, %cst_16 {dimension_numbers = #tpu.dot_dimension_numbers<[2], [0], [0, 1], [1], [0, 0, 0, 1, 1, 1], [], []>} : vector<2x14x32xbf16>, vector<32x128xbf16>, vector<2x14x128xf32> -> vector<2x14x128xf32>
    %13 = arith.addf %8, %12 : vector<2x14x128xf32>
    %c0_17 = arith.constant 0 : index
    %c3 = arith.constant 3 : index
    %c0_18 = arith.constant 0 : index
    %14 = vector.load %arg1[%c0_17, %c3, %c0_18] : memref<2x18x32xbf16, #tpu.memory_space<vmem>>, vector<2x14x32xbf16>
    %c3_19 = arith.constant 3 : index
    %c0_20 = arith.constant 0 : index
    %c0_21 = arith.constant 0 : index
    %15 = vector.load %arg2[%c3_19, %c0_20, %c0_21] : memref<5x32x128xbf16, #tpu.memory_space<vmem>>, vector<1x32x128xbf16>
    %16 = vector.shape_cast %15 : vector<1x32x128xbf16> to vector<32x128xbf16>
    %cst_22 = arith.constant dense<0.000000e+00> : vector<2x14x128xf32>
    %17 = tpu.matmul %14, %16, %cst_22 {dimension_numbers = #tpu.dot_dimension_numbers<[2], [0], [0, 1], [1], [0, 0, 0, 1, 1, 1], [], []>} : vector<2x14x32xbf16>, vector<32x128xbf16>, vector<2x14x128xf32> -> vector<2x14x128xf32>
    %18 = arith.addf %13, %17 : vector<2x14x128xf32>
    %c0_23 = arith.constant 0 : index
    %c4 = arith.constant 4 : index
    %c0_24 = arith.constant 0 : index
    %19 = vector.load %arg1[%c0_23, %c4, %c0_24] : memref<2x18x32xbf16, #tpu.memory_space<vmem>>, vector<2x14x32xbf16>
    %c4_25 = arith.constant 4 : index
    %c0_26 = arith.constant 0 : index
    %c0_27 = arith.constant 0 : index
    %20 = vector.load %arg2[%c4_25, %c0_26, %c0_27] : memref<5x32x128xbf16, #tpu.memory_space<vmem>>, vector<1x32x128xbf16>
    %21 = vector.shape_cast %20 : vector<1x32x128xbf16> to vector<32x128xbf16>
    %cst_28 = arith.constant dense<0.000000e+00> : vector<2x14x128xf32>
    %22 = tpu.matmul %19, %21, %cst_28 {dimension_numbers = #tpu.dot_dimension_numbers<[2], [0], [0, 1], [1], [0, 0, 0, 1, 1, 1], [], []>} : vector<2x14x32xbf16>, vector<32x128xbf16>, vector<2x14x128xf32> -> vector<2x14x128xf32>
    %23 = arith.addf %18, %22 : vector<2x14x128xf32>
    %24 = tpu.iota {dimensions = array<i32: 0>} : vector<14x128xi32>
    %25 = tpu.iota {dimensions = array<i32: 1>} : vector<14x128xi32>
    %c32_i32 = arith.constant 32 : i32
    %26 = vector.broadcast %c32_i32 : i32 to vector<14x128xi32>
    %27 = arith.cmpi slt, %25, %26 : vector<14x128xi32>
    %c64_i32 = arith.constant 64 : i32
    %28 = vector.broadcast %c64_i32 : i32 to vector<14x128xi32>
    %29 = arith.cmpi slt, %25, %28 : vector<14x128xi32>
    %c4_i32 = arith.constant 4 : i32
    %c5_i32 = arith.constant 5 : i32
    %30 = vector.broadcast %c4_i32 : i32 to vector<14x128xi32>
    %31 = vector.broadcast %c5_i32 : i32 to vector<14x128xi32>
    %32 = arith.select %29, %30, %31 : vector<14x128xi1>, vector<14x128xi32>
    %c3_i32 = arith.constant 3 : i32
    %33 = vector.broadcast %c3_i32 : i32 to vector<14x128xi32>
    %34 = arith.select %27, %33, %32 : vector<14x128xi1>, vector<14x128xi32>
    %35 = arith.addi %24, %34 : vector<14x128xi32>
    %c16_i32 = arith.constant 16 : i32
    %36 = vector.broadcast %c16_i32 : i32 to vector<14x128xi32>
    %37 = arith.cmpi sle, %35, %36 : vector<14x128xi32>
    %38 = vector.shape_cast %37 : vector<14x128xi1> to vector<1x14x128xi1>
    %cst_29 = arith.constant 0xFF800000 : f32
    %39 = vector.shape_cast %38 : vector<1x14x128xi1> to vector<1x14x128xi1>
    %40 = vector.broadcast %39 : vector<1x14x128xi1> to vector<2x14x128xi1>
    %41 = vector.broadcast %cst_29 : f32 to vector<2x14x128xf32>
    %42 = arith.select %40, %23, %41 : vector<2x14x128xi1>, vector<2x14x128xf32>
    %cst_30 = arith.constant dense<0xFF800000> : vector<2x128xf32>
    %43 = vector.multi_reduction <maximumf>, %42, %cst_30 [1] : vector<2x14x128xf32> to vector<2x128xf32>
    %c0_31 = arith.constant 0 : index
    %c0_32 = arith.constant 0 : index
    %44 = vector.load %arg3[%c0_31, %c0_32] : memref<1x128xf32, #tpu.memory_space<vmem>>, vector<1x128xf32>
    %45 = vector.broadcast %44 : vector<1x128xf32> to vector<2x128xf32>
    %46 = arith.addf %43, %45 : vector<2x128xf32>
    %cst_33 = arith.constant 0.000000e+00 : f32
    %47 = vector.broadcast %cst_33 : f32 to vector<2x128xf32>
    %48 = arith.maximumf %46, %47 : vector<2x128xf32>
    %c0_34 = arith.constant 0 : index
    %c0_35 = arith.constant 0 : index
    %49 = vector.load %arg4[%c0_34, %c0_35] : memref<2x128xf32, #tpu.memory_space<vmem>>, vector<2x128xf32>
    tpu.vector_store %arg4[%c0_34, %c0_35], %48 {strides = array<i32>} : memref<2x128xf32, #tpu.memory_space<vmem>>, vector<2x128xf32>,
    return
  }
  func.func @transform_0(%arg0: i32) -> (i32, i32, i32) {
    %c0_i32 = arith.constant 0 : i32
    %c0_i32_0 = arith.constant 0 : i32
    %c0_i32_1 = arith.constant 0 : i32
    return %arg0, %c0_i32, %c0_i32_0 : i32, i32, i32
  }
  func.func @transform_1(%arg0: i32) -> (i32, i32, i32) {
    %c0_i32 = arith.constant 0 : i32
    %c0_i32_0 = arith.constant 0 : i32
    %c0_i32_1 = arith.constant 0 : i32
    %c0_i32_2 = arith.constant 0 : i32
    return %c0_i32, %c0_i32_0, %c0_i32_1 : i32, i32, i32
  }
  func.func @transform_2(%arg0: i32) -> (i32, i32) {
    %c0_i32 = arith.constant 0 : i32
    %c0_i32_0 = arith.constant 0 : i32
    %c0_i32_1 = arith.constant 0 : i32
    return %c0_i32, %c0_i32_0 : i32, i32
  }
  func.func @transform_3(%arg0: i32) -> (i32, i32) {
    %c0_i32 = arith.constant 0 : i32
    %c0_i32_0 = arith.constant 0 : i32
    return %arg0, %c0_i32 : i32, i32
  }
}

</mosaic_0001>

<llo_original>
// kernel: tpu_custom_call.1
$region0: #{tpu_custom_call.1}
  #allocation0 [shape = 'u32[]', space=smem, size = 0x4, offset = 0x4, fixed_abs, tag = 'smem constant byte address 0x4 - core index']
  #allocation1 [shape = 'u32[72,128]{1,0:T(1,128)}', space=vmem, size = 0x9000, scoped, tag = 'internal scratch']
  %s0 = inlined_call_operand.vmem [shape: bf16[2,18,32], index: 0, kind: input, shape index: {}]
  %s1 = inlined_call_operand.hbm [shape: bf16[5,32,128], index: 1, kind: input, shape index: {}]
  %s2 = inlined_call_operand.vmem [shape: f32[1,128], index: 2, kind: input, shape index: {}]
  %s3 = inlined_call_operand.hbm [shape: f32[2,128], index: 3, kind: output, shape index: {}]
  %s4 = sld [smem:[#allocation0]]
  $region26: #{tpu_custom_call.1} parent=0
    _
  %s6 = ssub.s32 1, %s4
  %s7 = scalar_select 0, %s6, %s4
  $region1: #{tpu_custom_call.1} parent=0
    #allocation2 [shape = 'u8[40960]{0}', space=vmem, size = 0xa000, scoped, tag = 'input window, operand 1, single buffered']
    #allocation3 [shape = 's32[1]{0}', space=sflag, size = 0x4, scoped, tag = 'scoped memory for tpu_custom_call.1']
    #allocation4 [shape = 's32[1]{0}', space=sflag, size = 0x4, scoped, tag = 'scoped memory for tpu_custom_call.1']
    #allocation5 [shape = 'u8[1024]{0}', space=vmem, size = 0x400, scoped, tag = 'output window, operand 0, single buffered']
    %8 = vsyncpa [#allocation3], 0
    %9 = vsyncpa [#allocation4], 0
    // Predicated region
    $region2: #{tpu_custom_call.1} parent=1 // pred_check
      _
    $region3: #{tpu_custom_call.1} parent=1 // pred_check_branch
      %11 = sbr.rel (0) target = $region5
    $region4: #{tpu_custom_call.1} parent=1 // pred_region
      _
    $region5: #{tpu_custom_call.1} parent=1 // pred_fallthru
      _
    // Predicated region
    $region6: #{tpu_custom_call.1} parent=1 // pred_check
      _
    $region7: #{tpu_custom_call.1} parent=1 // pred_check_branch
      %13 = sbr.rel (0) target = $region9
    $region8: #{tpu_custom_call.1} parent=1 // pred_region
      %15 = vsyncadd [#allocation3], 0
      %s16 = sshll.u32 %s1, 4
      %s17 = int_to_ptr.hbm [resolvable:$true] %s16
      %s18 = sshll.u32 [#allocation2], 4
      %s19 = int_to_ptr.vmem [resolvable:$true] %s18
      %24 = dma.hbm_to_vmem [thread:$0]  %s17, 1280, %s19, [#allocation3], 64, 64, 4
    $region9: #{tpu_custom_call.1} parent=1 // pred_fallthru
      _
    // Predicated region
    $region10: #{tpu_custom_call.1} parent=1 // pred_check
      _
    $region11: #{tpu_custom_call.1} parent=1 // pred_check_branch
      %26 = sbr.rel (0) target = $region13
    $region12: #{tpu_custom_call.1} parent=1 // pred_region
      _
    $region13: #{tpu_custom_call.1} parent=1 // pred_fallthru
      _
    // Predicated region
    $region14: #{tpu_custom_call.1} parent=1 // pred_check
      _
    $region15: #{tpu_custom_call.1} parent=1 // pred_check_branch
      %28 = sbr.rel (0) target = $region17
    $region16: #{tpu_custom_call.1} parent=1 // pred_region
      %30 = dma.done [#allocation3], 1280
    $region17: #{tpu_custom_call.1} parent=1 // pred_fallthru
      _
    %v32 = vld [vmem:[%s0] sm:$0xf]
    %v33 = vld [vmem:[%s0 + $0x4] sm:$0x7]
    %v34 = vld [vmem:[%s0 + $0xc] sm:$0xf]
    %v35 = vld [vmem:[%s0 + $0x10] sm:$0x7]
    %v36 = vld [vmem:[#allocation2] sm:$0xf]
    %v37 = vld [vmem:[#allocation2 + $0x4] sm:$0xf]
    %v38 = vld [vmem:[#allocation2 + $0x8] sm:$0xf]
    %v39 = vld [vmem:[#allocation2 + $0xc] sm:$0xf]
    %v40 = vld [vmem:[%s0 + $0x4] sm:$0xf]
    %v41 = vld [vmem:[%s0 + $0x10] sm:$0xf]
    %s42 = scalar_lea.vmem [#allocation2], 16
    %v43 = vld [vmem:[%s42] sm:$0xf]
    %v44 = vld [vmem:[%s42 + $0x4] sm:$0xf]
    %v45 = vld [vmem:[%s42 + $0x8] sm:$0xf]
    %v46 = vld [vmem:[%s42 + $0xc] sm:$0xf]
    %v51 = vrot.slane %v32, 3
    %v52 = vrot.slane %v40, 3
    %v53 = vrot.slane %v34, 3
    %v54 = vrot.slane %v41, 3
    %vm55 = vcmask 1040384
    %v58 = vsel %vm55, %v32, %v51
    %vm59 = vcmask 1041409
    %v60 = vsel %vm59, %v32, %v51
    %v62 = vrot.slane %v60, 1
    %vm63 = vcmask 1042434
    %v64 = vsel %vm63, %v32, %v51
    %v66 = vrot.slane %v64, 2
    %vm67 = vcmask 1043459
    %v68 = vsel %vm67, %v32, %v51
    %v70 = vrot.slane %v68, 3
    %v73 = vsel %vm55, %v40, %v52
    %v74 = vsel %vm59, %v40, %v52
    %v76 = vrot.slane %v74, 1
    %v77 = vsel %vm63, %v40, %v52
    %v79 = vrot.slane %v77, 2
    %v80 = vsel %vm67, %v40, %v52
    %v82 = vrot.slane %v80, 3
    %v85 = vsel %vm55, %v34, %v53
    %v86 = vsel %vm59, %v34, %v53
    %v88 = vrot.slane %v86, 1
    %v89 = vsel %vm63, %v34, %v53
    %v91 = vrot.slane %v89, 2
    %v92 = vsel %vm67, %v34, %v53
    %v94 = vrot.slane %v92, 3
    %v97 = vsel %vm55, %v41, %v54
    %v98 = vsel %vm59, %v41, %v54
    %v100 = vrot.slane %v98, 1
    %v101 = vsel %vm63, %v41, %v54
    %v103 = vrot.slane %v101, 2
    %v104 = vsel %vm67, %v41, %v54
    %v106 = vrot.slane %v104, 3
    %vm107 = vsmask.f32 256
    %vm108 = vsmask.f32 1284
    %vm109 = vmor %vm107, %vm108
    %vm110 = vsmask.f32 2312
    %vm111 = vmor %vm109, %vm110
    %vm112 = vsmask.f32 3340
    %vm113 = vmor %vm111, %vm112
    %vm114 = vsmask.f32 4368
    %vm115 = vmor %vm113, %vm114
    %vm116 = vsmask.f32 5396
    %vm117 = vmor %vm115, %vm116
    %vm118 = vsmask.f32 6424
    %vm119 = vmor %vm117, %vm118
    %vm120 = vsmask.f32 7452
    %vm121 = vmor %vm119, %vm120
    %v122 = vshrl.u32 %v58, 16
    %v124 = vrot.slane %v122, 7
    %v125 = vrot.slane %v124, 1
    %v127 = vshll.u32 %v62, 16
    %v129 = vsel %vm121, %v125, %v127
    %v130 = vshrl.u32 %v62, 16
    %v132 = vrot.slane %v130, 7
    %v133 = vrot.slane %v132, 1
    %v135 = vshll.u32 %v66, 16
    %v137 = vsel %vm121, %v133, %v135
    %v138 = vshrl.u32 %v66, 16
    %v140 = vrot.slane %v138, 7
    %v141 = vrot.slane %v140, 1
    %v143 = vshll.u32 %v70, 16
    %v145 = vsel %vm121, %v141, %v143
    %v146 = vshrl.u32 %v70, 16
    %v148 = vrot.slane %v146, 7
    %v149 = vrot.slane %v148, 1
    %v150 = vshll.u32 %v73, 16
    %v152 = vsel %vm121, %v149, %v150
    %v153 = vshrl.u32 %v73, 16
    %v155 = vrot.slane %v153, 7
    %v156 = vrot.slane %v155, 1
    %v158 = vshll.u32 %v76, 16
    %v160 = vsel %vm121, %v156, %v158
    %v161 = vshrl.u32 %v76, 16
    %v163 = vrot.slane %v161, 7
    %v164 = vrot.slane %v163, 1
    %v166 = vshll.u32 %v79, 16
    %v168 = vsel %vm121, %v164, %v166
    %v169 = vshrl.u32 %v79, 16
    %v171 = vrot.slane %v169, 7
    %v172 = vrot.slane %v171, 1
    %v174 = vshll.u32 %v82, 16
    %v176 = vsel %vm121, %v172, %v174
    %v177 = vshrl.u32 %v85, 16
    %v179 = vrot.slane %v177, 7
    %v180 = vrot.slane %v179, 1
    %v182 = vshll.u32 %v88, 16
    %v184 = vsel %vm121, %v180, %v182
    %v185 = vshrl.u32 %v88, 16
    %v187 = vrot.slane %v185, 7
    %v188 = vrot.slane %v187, 1
    %v190 = vshll.u32 %v91, 16
    %v192 = vsel %vm121, %v188, %v190
    %v193 = vshrl.u32 %v91, 16
    %v195 = vrot.slane %v193, 7
    %v196 = vrot.slane %v195, 1
    %v198 = vshll.u32 %v94, 16
    %v200 = vsel %vm121, %v196, %v198
    %v201 = vshrl.u32 %v94, 16
    %v203 = vrot.slane %v201, 7
    %v204 = vrot.slane %v203, 1
    %v205 = vshll.u32 %v97, 16
    %v207 = vsel %vm121, %v204, %v205
    %v208 = vshrl.u32 %v97, 16
    %v210 = vrot.slane %v208, 7
    %v211 = vrot.slane %v210, 1
    %v213 = vshll.u32 %v100, 16
    %v215 = vsel %vm121, %v211, %v213
    %v216 = vshrl.u32 %v100, 16
    %v218 = vrot.slane %v216, 7
    %v219 = vrot.slane %v218, 1
    %v221 = vshll.u32 %v103, 16
    %v223 = vsel %vm121, %v219, %v221
    %v224 = vshrl.u32 %v103, 16
    %v226 = vrot.slane %v224, 7
    %v227 = vrot.slane %v226, 1
    %v229 = vshll.u32 %v106, 16
    %v231 = vsel %vm121, %v227, %v229
    %233 = vst [vmem:[#allocation1] ss:$9 sm:$0xff] %v129
    %s235 = scalar_lea.vmem [#allocation1], 1
    %236 = vst [vmem:[%s235] ss:$9 sm:$0xff] %v137
    %s238 = scalar_lea.vmem [#allocation1], 2
    %239 = vst [vmem:[%s238] ss:$9 sm:$0xff] %v145
    %s241 = scalar_lea.vmem [#allocation1], 3
    %242 = vst [vmem:[%s241] ss:$9 sm:$0xff] %v152
    %s244 = scalar_lea.vmem [#allocation1], 4
    %245 = vst [vmem:[%s244] ss:$9 sm:$0xff] %v160
    %s247 = scalar_lea.vmem [#allocation1], 5
    %248 = vst [vmem:[%s247] ss:$9 sm:$0xff] %v168
    %s250 = scalar_lea.vmem [#allocation1], 6
    %251 = vst [vmem:[%s250] ss:$9 sm:$0xff] %v176
    %s253 = scalar_lea.vmem [#allocation1], 7
    %254 = vst [vmem:[%s253] ss:$9 sm:$0xff] %v184
    %v255 = vld [vmem:[#allocation1] sm:$0xff]
    %257 = vst [vmem:[#allocation1] ss:$9 sm:$0xff] %v192
    %259 = vst [vmem:[%s235] ss:$9 sm:$0xff] %v200
    %261 = vst [vmem:[%s238] ss:$9 sm:$0xff] %v207
    %263 = vst [vmem:[%s241] ss:$9 sm:$0xff] %v215
    %265 = vst [vmem:[%s244] ss:$9 sm:$0xff] %v223
    %267 = vst [vmem:[%s247] ss:$9 sm:$0xff] %v231
    %v268 = vld [vmem:[#allocation1] sm:$0xff]
    %v273 = vunpack.c.l.b16 %v43
    %v274 = vunpack.c.l.b16 %v44
    %v275 = vunpack.c.l.b16 %v45
    %v276 = vunpack.c.l.b16 %v46
    %v277 = vpack.c.b16 %v274, %v273
    %v278 = vpack.c.b16 %v276, %v275
    %vm281 = vcmask 261120
    %v282 = vsel %vm281, %v255, 0
    %v284 = vsel %vm281, %v268, 0
    %286 = vmatpush.bf16.msra.mxu0 0
    %287 = vmatpush.bf16.msra.mxu0 0
    %288 = vmatpush.bf16.msra.mxu0 0
    %289 = vmatpush.bf16.msra.mxu0 0
    %290 = vmatpush.bf16.msra.mxu0 0
    %291 = vmatpush.bf16.msra.mxu0 0
    %292 = vmatpush.bf16.msra.mxu0 %v278
    %293 = vmatpush.bf16.msra.mxu0 %v277
    %294 = vmatmul.bf16.gmra.mxu0 %v282
    %v295 = vpop.f32.mrf.mxu0
    %v296 = vadd.f32 0.0, %v295
    %v297 = vpop.f32.mrf.mxu0
    %v298 = vadd.f32 0.0, %v297
    %299 = vmatmul.bf16.gmra.mxu0 %v284
    %v300 = vpop.f32.mrf.mxu0
    %v301 = vadd.f32 0.0, %v300
    %v302 = vpop.f32.mrf.mxu0
    %v303 = vadd.f32 0.0, %v302
    %304 = vdwg.mxu0
    %v307 = vrot.slane %v33, 3
    %v308 = vrot.slane %v35, 3
    %v311 = vsel %vm55, %v33, %v307
    %v312 = vsel %vm59, %v33, %v307
    %v314 = vrot.slane %v312, 1
    %v315 = vsel %vm63, %v33, %v307
    %v317 = vrot.slane %v315, 2
    %v320 = vsel %vm55, %v35, %v308
    %v321 = vsel %vm59, %v35, %v308
    %v323 = vrot.slane %v321, 1
    %v324 = vsel %vm63, %v35, %v308
    %v326 = vrot.slane %v324, 2
    %327 = vst [vmem:[#allocation1] ss:$9 sm:$0xff] %v58
    %s328 = scalar_lea.vmem [#allocation1], 1
    %329 = vst [vmem:[%s328] ss:$9 sm:$0xff] %v62
    %s330 = scalar_lea.vmem [#allocation1], 2
    %331 = vst [vmem:[%s330] ss:$9 sm:$0xff] %v66
    %s332 = scalar_lea.vmem [#allocation1], 3
    %333 = vst [vmem:[%s332] ss:$9 sm:$0xff] %v70
    %s334 = scalar_lea.vmem [#allocation1], 4
    %335 = vst [vmem:[%s334] ss:$9 sm:$0xff] %v311
    %s337 = scalar_lea.vmem [#allocation1], 5
    %338 = vst [vmem:[%s337] ss:$9 sm:$0xff] %v314
    %s340 = scalar_lea.vmem [#allocation1], 6
    %341 = vst [vmem:[%s340] ss:$9 sm:$0xff] %v317
    %s342 = scalar_lea.vmem [#allocation1], 7
    %343 = vst [vmem:[%s342] ss:$9 sm:$0xff] %v85
    %v344 = vld [vmem:[#allocation1] sm:$0xff]
    %345 = vst [vmem:[#allocation1] ss:$9 sm:$0xff] %v88
    %346 = vst [vmem:[%s328] ss:$9 sm:$0xff] %v91
    %347 = vst [vmem:[%s330] ss:$9 sm:$0xff] %v94
    %348 = vst [vmem:[%s332] ss:$9 sm:$0xff] %v320
    %350 = vst [vmem:[%s334] ss:$9 sm:$0xff] %v323
    %352 = vst [vmem:[%s337] ss:$9 sm:$0xff] %v326
    %v353 = vld [vmem:[#allocation1] sm:$0xff]
    %v358 = vunpack.c.l.b16 %v36
    %v359 = vunpack.c.l.b16 %v37
    %v360 = vunpack.c.l.b16 %v38
    %v361 = vunpack.c.l.b16 %v39
    %v362 = vpack.c.b16 %v359, %v358
    %v363 = vpack.c.b16 %v361, %v360
    %v366 = vsel %vm281, %v344, 0
    %v368 = vsel %vm281, %v353, 0
    %370 = vmatpush.bf16.msra.mxu0 0
    %371 = vmatpush.bf16.msra.mxu0 0
    %372 = vmatpush.bf16.msra.mxu0 0
    %373 = vmatpush.bf16.msra.mxu0 0
    %374 = vmatpush.bf16.msra.mxu0 0
    %375 = vmatpush.bf16.msra.mxu0 0
    %376 = vmatpush.bf16.msra.mxu0 %v363
    %377 = vmatpush.bf16.msra.mxu0 %v362
    %378 = vmatmul.bf16.gmra.mxu0 %v366
    %v379 = vpop.f32.mrf.mxu0
    %v380 = vadd.f32 %v296, %v379
    %v381 = vpop.f32.mrf.mxu0
    %v382 = vadd.f32 %v298, %v381
    %383 = vmatmul.bf16.gmra.mxu0 %v368
    %v384 = vpop.f32.mrf.mxu0
    %v385 = vadd.f32 %v301, %v384
    %v386 = vpop.f32.mrf.mxu0
    %v387 = vadd.f32 %v303, %v386
    %388 = vdwg.mxu0
    %v393 = vrot.slane %v380, 2
    %v394 = vrot.slane %v380, 4
    %v395 = vrot.slane %v380, 6
    %v396 = vrot.slane %v382, 2
    %v397 = vrot.slane %v382, 4
    %v398 = vrot.slane %v382, 6
    %v399 = vrot.slane %v385, 2
    %v400 = vrot.slane %v385, 4
    %v401 = vrot.slane %v385, 6
    %v402 = vrot.slane %v387, 2
    %v413 = vld [vmem:[%s0] sm:$0xe]
    %v414 = vld [vmem:[%s0 + $0x4] sm:$0xf]
    %v415 = vld [vmem:[%s0 + $0xc] sm:$0xe]
    %v416 = vld [vmem:[%s0 + $0x10] sm:$0xf]
    %s417 = scalar_lea.vmem [#allocation2], 32
    %v418 = vld [vmem:[%s417] sm:$0xf]
    %v419 = vld [vmem:[%s417 + $0x4] sm:$0xf]
    %v420 = vld [vmem:[%s417 + $0x8] sm:$0xf]
    %v421 = vld [vmem:[%s417 + $0xc] sm:$0xf]
    %423 = vst [vmem:[#allocation1] sm:$0xff] %v413
    %425 = vst [vmem:[#allocation1 + $0x20] sm:$0xff] %v414
    %s426 = scalar_lea.vmem [#allocation1], 1
    %v427 = vld [vmem:[%s426] ss:$4 sm:$0xff]
    %s428 = scalar_lea.vmem [#allocation1], 2
    %v429 = vld [vmem:[%s428] ss:$4 sm:$0xff]
    %s430 = scalar_lea.vmem [#allocation1], 3
    %v431 = vld [vmem:[%s430] ss:$4 sm:$0xff]
    %s432 = scalar_lea.vmem [#allocation1], 32
    %v433 = vld [vmem:[%s432] ss:$4 sm:$0xff]
    %s434 = scalar_lea.vmem [#allocation1], 33
    %v435 = vld [vmem:[%s434] ss:$4 sm:$0xff]
    %s436 = scalar_lea.vmem [#allocation1], 34
    %v437 = vld [vmem:[%s436] ss:$4 sm:$0xff]
    %s438 = scalar_lea.vmem [#allocation1], 35
    %v439 = vld [vmem:[%s438] ss:$4 sm:$0xff]
    %441 = vst [vmem:[#allocation1] sm:$0xff] %v415
    %443 = vst [vmem:[#allocation1 + $0x20] sm:$0xff] %v416
    %v444 = vld [vmem:[%s426] ss:$4 sm:$0xff]
    %v445 = vld [vmem:[%s428] ss:$4 sm:$0xff]
    %v446 = vld [vmem:[%s430] ss:$4 sm:$0xff]
    %v447 = vld [vmem:[%s432] ss:$4 sm:$0xff]
    %v448 = vld [vmem:[%s434] ss:$4 sm:$0xff]
    %v449 = vld [vmem:[%s436] ss:$4 sm:$0xff]
    %v450 = vld [vmem:[%s438] ss:$4 sm:$0xff]
    %451 = vst [vmem:[#allocation1] ss:$9 sm:$0xff] %v427
    %s452 = scalar_lea.vmem [#allocation1], 1
    %453 = vst [vmem:[%s452] ss:$9 sm:$0xff] %v429
    %s454 = scalar_lea.vmem [#allocation1], 2
    %455 = vst [vmem:[%s454] ss:$9 sm:$0xff] %v431
    %s456 = scalar_lea.vmem [#allocation1], 3
    %457 = vst [vmem:[%s456] ss:$9 sm:$0xff] %v433
    %s458 = scalar_lea.vmem [#allocation1], 4
    %459 = vst [vmem:[%s458] ss:$9 sm:$0xff] %v435
    %s460 = scalar_lea.vmem [#allocation1], 5
    %461 = vst [vmem:[%s460] ss:$9 sm:$0xff] %v437
    %s462 = scalar_lea.vmem [#allocation1], 6
    %463 = vst [vmem:[%s462] ss:$9 sm:$0xff] %v439
    %s464 = scalar_lea.vmem [#allocation1], 7
    %465 = vst [vmem:[%s464] ss:$9 sm:$0xff] %v444
    %v466 = vld [vmem:[#allocation1] sm:$0xff]
    %467 = vst [vmem:[#allocation1] ss:$9 sm:$0xff] %v445
    %468 = vst [vmem:[%s452] ss:$9 sm:$0xff] %v446
    %469 = vst [vmem:[%s454] ss:$9 sm:$0xff] %v447
    %470 = vst [vmem:[%s456] ss:$9 sm:$0xff] %v448
    %471 = vst [vmem:[%s458] ss:$9 sm:$0xff] %v449
    %472 = vst [vmem:[%s460] ss:$9 sm:$0xff] %v450
    %v473 = vld [vmem:[#allocation1] sm:$0xff]
    %v478 = vunpack.c.l.b16 %v418
    %v479 = vunpack.c.l.b16 %v419
    %v480 = vunpack.c.l.b16 %v420
    %v481 = vunpack.c.l.b16 %v421
    %v482 = vpack.c.b16 %v479, %v478
    %v483 = vpack.c.b16 %v481, %v480
    %v486 = vsel %vm281, %v466, 0
    %v488 = vsel %vm281, %v473, 0
    %490 = vmatpush.bf16.msra.mxu0 0
    %491 = vmatpush.bf16.msra.mxu0 0
    %492 = vmatpush.bf16.msra.mxu0 0
    %493 = vmatpush.bf16.msra.mxu0 0
    %494 = vmatpush.bf16.msra.mxu0 0
    %495 = vmatpush.bf16.msra.mxu0 0
    %496 = vmatpush.bf16.msra.mxu0 %v483
    %497 = vmatpush.bf16.msra.mxu0 %v482
    %498 = vmatmul.bf16.gmra.mxu0 %v486
    %v499 = vpop.f32.mrf.mxu0
    %v500 = vadd.f32 0.0, %v499
    %v501 = vpop.f32.mrf.mxu0
    %v502 = vadd.f32 0.0, %v501
    %503 = vmatmul.bf16.gmra.mxu0 %v488
    %v504 = vpop.f32.mrf.mxu0
    %v505 = vadd.f32 0.0, %v504
    %v506 = vpop.f32.mrf.mxu0
    %v507 = vadd.f32 0.0, %v506
    %508 = vdwg.mxu0
    %v513 = vrot.slane %v500, 2
    %v514 = vrot.slane %v500, 4
    %v515 = vrot.slane %v500, 6
    %v516 = vrot.slane %v502, 2
    %v517 = vrot.slane %v502, 4
    %v518 = vrot.slane %v502, 6
    %v519 = vrot.slane %v505, 2
    %v520 = vrot.slane %v505, 4
    %v521 = vrot.slane %v505, 6
    %v522 = vrot.slane %v507, 2
    %v533 = vadd.f32 %v380, %v500
    %v534 = vadd.f32 %v393, %v513
    %v535 = vadd.f32 %v394, %v514
    %v536 = vadd.f32 %v395, %v515
    %v537 = vadd.f32 %v382, %v502
    %v538 = vadd.f32 %v396, %v516
    %v539 = vadd.f32 %v397, %v517
    %v540 = vadd.f32 %v398, %v518
    %v541 = vadd.f32 %v385, %v505
    %v542 = vadd.f32 %v399, %v519
    %v543 = vadd.f32 %v400, %v520
    %v544 = vadd.f32 %v401, %v521
    %v545 = vadd.f32 %v387, %v507
    %v546 = vadd.f32 %v402, %v522
    %v547 = vld [vmem:[%s0] sm:$0xe]
    %v548 = vld [vmem:[%s0 + $0x4] sm:$0xf]
    %v549 = vld [vmem:[%s0 + $0x8] sm:$0x1]
    %v550 = vld [vmem:[%s0 + $0xc] sm:$0xe]
    %v551 = vld [vmem:[%s0 + $0x10] sm:$0xf]
    %v552 = vld [vmem:[%s0 + $0x14] sm:$0x1]
    %s553 = scalar_lea.vmem [#allocation2], 48
    %v554 = vld [vmem:[%s553] sm:$0xf]
    %v555 = vld [vmem:[%s553 + $0x4] sm:$0xf]
    %v556 = vld [vmem:[%s553 + $0x8] sm:$0xf]
    %v557 = vld [vmem:[%s553 + $0xc] sm:$0xf]
    %559 = vst [vmem:[#allocation1] sm:$0xff] %v547
    %561 = vst [vmem:[#allocation1 + $0x20] sm:$0xff] %v548
    %s562 = scalar_lea.vmem [#allocation1], 1
    %v563 = vld [vmem:[%s562] ss:$4 sm:$0xff]
    %s564 = scalar_lea.vmem [#allocation1], 2
    %v565 = vld [vmem:[%s564] ss:$4 sm:$0xff]
    %s566 = scalar_lea.vmem [#allocation1], 3
    %v567 = vld [vmem:[%s566] ss:$4 sm:$0xff]
    %s568 = scalar_lea.vmem [#allocation1], 32
    %v569 = vld [vmem:[%s568] ss:$4 sm:$0xff]
    %s570 = scalar_lea.vmem [#allocation1], 33
    %v571 = vld [vmem:[%s570] ss:$4 sm:$0xff]
    %s572 = scalar_lea.vmem [#allocation1], 34
    %v573 = vld [vmem:[%s572] ss:$4 sm:$0xff]
    %s574 = scalar_lea.vmem [#allocation1], 35
    %v575 = vld [vmem:[%s574] ss:$4 sm:$0xff]
    %577 = vst [vmem:[#allocation1] sm:$0xff] %v549
    %v578 = vld [vmem:[#allocation1] ss:$4 sm:$0xff]
    %580 = vst [vmem:[#allocation1 + $0x20] sm:$0xff] %v550
    %v581 = vld [vmem:[%s570] ss:$4 sm:$0xff]
    %v582 = vld [vmem:[%s572] ss:$4 sm:$0xff]
    %v583 = vld [vmem:[%s574] ss:$4 sm:$0xff]
    %585 = vst [vmem:[#allocation1] sm:$0xff] %v551
    %587 = vst [vmem:[#allocation1 + $0x20] sm:$0xff] %v552
    %v588 = vld [vmem:[#allocation1] ss:$4 sm:$0xff]
    %v589 = vld [vmem:[%s562] ss:$4 sm:$0xff]
    %v590 = vld [vmem:[%s564] ss:$4 sm:$0xff]
    %v591 = vld [vmem:[%s566] ss:$4 sm:$0xff]
    %v592 = vld [vmem:[%s568] ss:$4 sm:$0xff]
    %v593 = vshrl.u32 %v563, 16
    %v595 = vrot.slane %v593, 7
    %v596 = vrot.slane %v595, 1
    %v597 = vshll.u32 %v565, 16
    %v599 = vsel %vm121, %v596, %v597
    %v600 = vshrl.u32 %v565, 16
    %v602 = vrot.slane %v600, 7
    %v603 = vrot.slane %v602, 1
    %v604 = vshll.u32 %v567, 16
    %v606 = vsel %vm121, %v603, %v604
    %v607 = vshrl.u32 %v567, 16
    %v609 = vrot.slane %v607, 7
    %v610 = vrot.slane %v609, 1
    %v611 = vshll.u32 %v569, 16
    %v613 = vsel %vm121, %v610, %v611
    %v614 = vshrl.u32 %v569, 16
    %v616 = vrot.slane %v614, 7
    %v617 = vrot.slane %v616, 1
    %v618 = vshll.u32 %v571, 16
    %v620 = vsel %vm121, %v617, %v618
    %v621 = vshrl.u32 %v571, 16
    %v623 = vrot.slane %v621, 7
    %v624 = vrot.slane %v623, 1
    %v625 = vshll.u32 %v573, 16
    %v627 = vsel %vm121, %v624, %v625
    %v628 = vshrl.u32 %v573, 16
    %v630 = vrot.slane %v628, 7
    %v631 = vrot.slane %v630, 1
    %v632 = vshll.u32 %v575, 16
    %v634 = vsel %vm121, %v631, %v632
    %v635 = vshrl.u32 %v575, 16
    %v637 = vrot.slane %v635, 7
    %v638 = vrot.slane %v637, 1
    %v639 = vshll.u32 %v578, 16
    %v641 = vsel %vm121, %v638, %v639
    %v642 = vshrl.u32 %v581, 16
    %v644 = vrot.slane %v642, 7
    %v645 = vrot.slane %v644, 1
    %v646 = vshll.u32 %v582, 16
    %v648 = vsel %vm121, %v645, %v646
    %v649 = vshrl.u32 %v582, 16
    %v651 = vrot.slane %v649, 7
    %v652 = vrot.slane %v651, 1
    %v653 = vshll.u32 %v583, 16
    %v655 = vsel %vm121, %v652, %v653
    %v656 = vshrl.u32 %v583, 16
    %v658 = vrot.slane %v656, 7
    %v659 = vrot.slane %v658, 1
    %v660 = vshll.u32 %v588, 16
    %v662 = vsel %vm121, %v659, %v660
    %v663 = vshrl.u32 %v588, 16
    %v665 = vrot.slane %v663, 7
    %v666 = vrot.slane %v665, 1
    %v667 = vshll.u32 %v589, 16
    %v669 = vsel %vm121, %v666, %v667
    %v670 = vshrl.u32 %v589, 16
    %v672 = vrot.slane %v670, 7
    %v673 = vrot.slane %v672, 1
    %v674 = vshll.u32 %v590, 16
    %v676 = vsel %vm121, %v673, %v674
    %v677 = vshrl.u32 %v590, 16
    %v679 = vrot.slane %v677, 7
    %v680 = vrot.slane %v679, 1
    %v681 = vshll.u32 %v591, 16
    %v683 = vsel %vm121, %v680, %v681
    %v684 = vshrl.u32 %v591, 16
    %v686 = vrot.slane %v684, 7
    %v687 = vrot.slane %v686, 1
    %v688 = vshll.u32 %v592, 16
    %v690 = vsel %vm121, %v687, %v688
    %692 = vst [vmem:[#allocation1] ss:$9 sm:$0xff] %v599
    %s694 = scalar_lea.vmem [#allocation1], 1
    %695 = vst [vmem:[%s694] ss:$9 sm:$0xff] %v606
    %s697 = scalar_lea.vmem [#allocation1], 2
    %698 = vst [vmem:[%s697] ss:$9 sm:$0xff] %v613
    %s700 = scalar_lea.vmem [#allocation1], 3
    %701 = vst [vmem:[%s700] ss:$9 sm:$0xff] %v620
    %s703 = scalar_lea.vmem [#allocation1], 4
    %704 = vst [vmem:[%s703] ss:$9 sm:$0xff] %v627
    %s706 = scalar_lea.vmem [#allocation1], 5
    %707 = vst [vmem:[%s706] ss:$9 sm:$0xff] %v634
    %s709 = scalar_lea.vmem [#allocation1], 6
    %710 = vst [vmem:[%s709] ss:$9 sm:$0xff] %v641
    %s712 = scalar_lea.vmem [#allocation1], 7
    %713 = vst [vmem:[%s712] ss:$9 sm:$0xff] %v648
    %v714 = vld [vmem:[#allocation1] sm:$0xff]
    %716 = vst [vmem:[#allocation1] ss:$9 sm:$0xff] %v655
    %718 = vst [vmem:[%s694] ss:$9 sm:$0xff] %v662
    %720 = vst [vmem:[%s697] ss:$9 sm:$0xff] %v669
    %722 = vst [vmem:[%s700] ss:$9 sm:$0xff] %v676
    %724 = vst [vmem:[%s703] ss:$9 sm:$0xff] %v683
    %726 = vst [vmem:[%s706] ss:$9 sm:$0xff] %v690
    %v727 = vld [vmem:[#allocation1] sm:$0xff]
    %v732 = vunpack.c.l.b16 %v554
    %v733 = vunpack.c.l.b16 %v555
    %v734 = vunpack.c.l.b16 %v556
    %v735 = vunpack.c.l.b16 %v557
    %v736 = vpack.c.b16 %v733, %v732
    %v737 = vpack.c.b16 %v735, %v734
    %v740 = vsel %vm281, %v714, 0
    %v742 = vsel %vm281, %v727, 0
    %744 = vmatpush.bf16.msra.mxu0 0
    %745 = vmatpush.bf16.msra.mxu0 0
    %746 = vmatpush.bf16.msra.mxu0 0
    %747 = vmatpush.bf16.msra.mxu0 0
    %748 = vmatpush.bf16.msra.mxu0 0
    %749 = vmatpush.bf16.msra.mxu0 0
    %750 = vmatpush.bf16.msra.mxu0 %v737
    %751 = vmatpush.bf16.msra.mxu0 %v736
    %752 = vmatmul.bf16.gmra.mxu0 %v740
    %v753 = vpop.f32.mrf.mxu0
    %v754 = vadd.f32 0.0, %v753
    %v755 = vpop.f32.mrf.mxu0
    %v756 = vadd.f32 0.0, %v755
    %757 = vmatmul.bf16.gmra.mxu0 %v742
    %v758 = vpop.f32.mrf.mxu0
    %v759 = vadd.f32 0.0, %v758
    %v760 = vpop.f32.mrf.mxu0
    %v761 = vadd.f32 0.0, %v760
    %762 = vdwg.mxu0
    %v767 = vrot.slane %v754, 2
    %v768 = vrot.slane %v754, 4
    %v769 = vrot.slane %v754, 6
    %v770 = vrot.slane %v756, 2
    %v771 = vrot.slane %v756, 4
    %v772 = vrot.slane %v756, 6
    %v773 = vrot.slane %v759, 2
    %v774 = vrot.slane %v759, 4
    %v775 = vrot.slane %v759, 6
    %v776 = vrot.slane %v761, 2
    %v787 = vadd.f32 %v533, %v754
    %v788 = vadd.f32 %v534, %v767
    %v789 = vadd.f32 %v535, %v768
    %v790 = vadd.f32 %v536, %v769
    %v791 = vadd.f32 %v537, %v756
    %v792 = vadd.f32 %v538, %v770
    %v793 = vadd.f32 %v539, %v771
    %v794 = vadd.f32 %v540, %v772
    %v795 = vadd.f32 %v541, %v759
    %v796 = vadd.f32 %v542, %v773
    %v797 = vadd.f32 %v543, %v774
    %v798 = vadd.f32 %v544, %v775
    %v799 = vadd.f32 %v545, %v761
    %v800 = vadd.f32 %v546, %v776
    %v801 = vld [vmem:[%s0] sm:$0xc]
    %v802 = vld [vmem:[%s0 + $0x4] sm:$0xf]
    %v803 = vld [vmem:[%s0 + $0x8] sm:$0x1]
    %v804 = vld [vmem:[%s0 + $0xc] sm:$0xc]
    %v805 = vld [vmem:[%s0 + $0x10] sm:$0xf]
    %v806 = vld [vmem:[%s0 + $0x14] sm:$0x1]
    %s807 = scalar_lea.vmem [#allocation2], 64
    %v808 = vld [vmem:[%s807] sm:$0xf]
    %v809 = vld [vmem:[%s807 + $0x4] sm:$0xf]
    %v810 = vld [vmem:[%s807 + $0x8] sm:$0xf]
    %v811 = vld [vmem:[%s807 + $0xc] sm:$0xf]
    %813 = vst [vmem:[#allocation1] sm:$0xff] %v801
    %815 = vst [vmem:[#allocation1 + $0x20] sm:$0xff] %v802
    %s816 = scalar_lea.vmem [#allocation1], 2
    %v817 = vld [vmem:[%s816] ss:$4 sm:$0xff]
    %s818 = scalar_lea.vmem [#allocation1], 3
    %v819 = vld [vmem:[%s818] ss:$4 sm:$0xff]
    %s820 = scalar_lea.vmem [#allocation1], 32
    %v821 = vld [vmem:[%s820] ss:$4 sm:$0xff]
    %s822 = scalar_lea.vmem [#allocation1], 33
    %v823 = vld [vmem:[%s822] ss:$4 sm:$0xff]
    %s824 = scalar_lea.vmem [#allocation1], 34
    %v825 = vld [vmem:[%s824] ss:$4 sm:$0xff]
    %s826 = scalar_lea.vmem [#allocation1], 35
    %v827 = vld [vmem:[%s826] ss:$4 sm:$0xff]
    %829 = vst [vmem:[#allocation1] sm:$0xff] %v803
    %v830 = vld [vmem:[#allocation1] ss:$4 sm:$0xff]
    %832 = vst [vmem:[#allocation1 + $0x20] sm:$0xff] %v804
    %v833 = vld [vmem:[%s824] ss:$4 sm:$0xff]
    %v834 = vld [vmem:[%s826] ss:$4 sm:$0xff]
    %836 = vst [vmem:[#allocation1] sm:$0xff] %v805
    %838 = vst [vmem:[#allocation1 + $0x20] sm:$0xff] %v806
    %v839 = vld [vmem:[#allocation1] ss:$4 sm:$0xff]
    %s840 = scalar_lea.vmem [#allocation1], 1
    %v841 = vld [vmem:[%s840] ss:$4 sm:$0xff]
    %v842 = vld [vmem:[%s816] ss:$4 sm:$0xff]
    %v843 = vld [vmem:[%s818] ss:$4 sm:$0xff]
    %v844 = vld [vmem:[%s820] ss:$4 sm:$0xff]
    %845 = vst [vmem:[#allocation1] ss:$9 sm:$0xff] %v817
    %s846 = scalar_lea.vmem [#allocation1], 1
    %847 = vst [vmem:[%s846] ss:$9 sm:$0xff] %v819
    %s848 = scalar_lea.vmem [#allocation1], 2
    %849 = vst [vmem:[%s848] ss:$9 sm:$0xff] %v821
    %s850 = scalar_lea.vmem [#allocation1], 3
    %851 = vst [vmem:[%s850] ss:$9 sm:$0xff] %v823
    %s852 = scalar_lea.vmem [#allocation1], 4
    %853 = vst [vmem:[%s852] ss:$9 sm:$0xff] %v825
    %s854 = scalar_lea.vmem [#allocation1], 5
    %855 = vst [vmem:[%s854] ss:$9 sm:$0xff] %v827
    %s856 = scalar_lea.vmem [#allocation1], 6
    %857 = vst [vmem:[%s856] ss:$9 sm:$0xff] %v830
    %s858 = scalar_lea.vmem [#allocation1], 7
    %859 = vst [vmem:[%s858] ss:$9 sm:$0xff] %v833
    %v860 = vld [vmem:[#allocation1] sm:$0xff]
    %861 = vst [vmem:[#allocation1] ss:$9 sm:$0xff] %v834
    %862 = vst [vmem:[%s846] ss:$9 sm:$0xff] %v839
    %863 = vst [vmem:[%s848] ss:$9 sm:$0xff] %v841
    %864 = vst [vmem:[%s850] ss:$9 sm:$0xff] %v842
    %865 = vst [vmem:[%s852] ss:$9 sm:$0xff] %v843
    %866 = vst [vmem:[%s854] ss:$9 sm:$0xff] %v844
    %v867 = vld [vmem:[#allocation1] sm:$0xff]
    %v872 = vunpack.c.l.b16 %v808
    %v873 = vunpack.c.l.b16 %v809
    %v874 = vunpack.c.l.b16 %v810
    %v875 = vunpack.c.l.b16 %v811
    %v876 = vpack.c.b16 %v873, %v872
    %v877 = vpack.c.b16 %v875, %v874
    %v880 = vsel %vm281, %v860, 0
    %v882 = vsel %vm281, %v867, 0
    %884 = vmatpush.bf16.msra.mxu0 0
    %885 = vmatpush.bf16.msra.mxu0 0
    %886 = vmatpush.bf16.msra.mxu0 0
    %887 = vmatpush.bf16.msra.mxu0 0
    %888 = vmatpush.bf16.msra.mxu0 0
    %889 = vmatpush.bf16.msra.mxu0 0
    %890 = vmatpush.bf16.msra.mxu0 %v877
    %891 = vmatpush.bf16.msra.mxu0 %v876
    %892 = vmatmul.bf16.gmra.mxu0 %v880
    %v893 = vpop.f32.mrf.mxu0
    %v894 = vadd.f32 0.0, %v893
    %v895 = vpop.f32.mrf.mxu0
    %v896 = vadd.f32 0.0, %v895
    %897 = vmatmul.bf16.gmra.mxu0 %v882
    %v898 = vpop.f32.mrf.mxu0
    %v899 = vadd.f32 0.0, %v898
    %v900 = vpop.f32.mrf.mxu0
    %v901 = vadd.f32 0.0, %v900
    %902 = vdwg.mxu0
    %v907 = vrot.slane %v894, 2
    %v908 = vrot.slane %v894, 4
    %v909 = vrot.slane %v894, 6
    %v910 = vrot.slane %v896, 2
    %v911 = vrot.slane %v896, 4
    %v912 = vrot.slane %v896, 6
    %v913 = vrot.slane %v899, 2
    %v914 = vrot.slane %v899, 4
    %v915 = vrot.slane %v899, 6
    %v916 = vrot.slane %v901, 2
    %v927 = vadd.f32 %v787, %v894
    %v928 = vadd.f32 %v788, %v907
    %v929 = vadd.f32 %v789, %v908
    %v930 = vadd.f32 %v790, %v909
    %v931 = vadd.f32 %v791, %v896
    %v932 = vadd.f32 %v792, %v910
    %v933 = vadd.f32 %v793, %v911
    %v934 = vadd.f32 %v794, %v912
    %v935 = vadd.f32 %v795, %v899
    %v936 = vadd.f32 %v796, %v913
    %v937 = vadd.f32 %v797, %v914
    %v938 = vadd.f32 %v798, %v915
    %v939 = vadd.f32 %v799, %v901
    %v940 = vadd.f32 %v800, %v916
    %v941 = vlaneseq
    %v942 = vshrl.u32 %v941, 7
    %v943 = vadd.s32 %v942, 8
    %v944 = vlaneseq
    %v945 = vand.u32 %v944, 127
    %vm946 = vcmp.lt.s32.totalorder %v945, 32
    %vm947 = vcmp.lt.s32.totalorder %v945, 64
    %v948 = vsel %vm947, 4, 5
    %v949 = vsel %vm946, 3, %v948
    %v950 = vadd.s32 %v942, %v949
    %v951 = vadd.s32 %v943, %v949
    %vm952 = vcmp.le.s32.totalorder %v950, 16
    %vm953 = vcmp.le.s32.totalorder %v951, 16
    %v954 = vsel %vm952, 1, 0
    %v955 = vsel %vm953, 1, 0
    %vm956 = vcmp.eq.s32.totalorder %v954, 1
    %vm957 = vcmp.eq.s32.totalorder %v955, 1
    %972 = vst [vmem:[#allocation1] ss:$4 sm:$0xff] %v927
    %s973 = scalar_lea.vmem [#allocation1], 1
    %974 = vst [vmem:[%s973] ss:$4 sm:$0xff] %v928
    %s975 = scalar_lea.vmem [#allocation1], 2
    %976 = vst [vmem:[%s975] ss:$4 sm:$0xff] %v929
    %s977 = scalar_lea.vmem [#allocation1], 3
    %978 = vst [vmem:[%s977] ss:$4 sm:$0xff] %v930
    %s979 = scalar_lea.vmem [#allocation1], 32
    %980 = vst [vmem:[%s979] ss:$4 sm:$0xff] %v931
    %s981 = scalar_lea.vmem [#allocation1], 33
    %982 = vst [vmem:[%s981] ss:$4 sm:$0xff] %v932
    %s983 = scalar_lea.vmem [#allocation1], 34
    %984 = vst [vmem:[%s983] ss:$4 sm:$0xff] %v933
    %v985 = vld.sshfl [vmem:[#allocation1] sm:$0xff pattern:$0x73625140]
    %v986 = vld.sshfl [vmem:[#allocation1 + $0x20] sm:$0xff pattern:$0x73625140]
    %987 = vst [vmem:[#allocation1] ss:$4 sm:$0xff] %v934
    %988 = vst [vmem:[%s973] ss:$4 sm:$0xff] %v935
    %989 = vst [vmem:[%s975] ss:$4 sm:$0xff] %v936
    %990 = vst [vmem:[%s977] ss:$4 sm:$0xff] %v937
    %991 = vst [vmem:[%s979] ss:$4 sm:$0xff] %v938
    %992 = vst [vmem:[%s981] ss:$4 sm:$0xff] %v939
    %993 = vst [vmem:[%s983] ss:$4 sm:$0xff] %v940
    %v994 = vld.sshfl [vmem:[#allocation1] sm:$0xff pattern:$0x73625140]
    %v995 = vld.sshfl [vmem:[#allocation1 + $0x20] sm:$0xff pattern:$0x73625140]
    %v1000 = vsel %vm956, %v985, -inf
    %v1001 = vsel %vm957, %v986, -inf
    %v1002 = vsel %vm956, %v994, -inf
    %v1003 = vsel %vm957, %v995, -inf
    %vm1004 = vcmask 1045504
    %v1005 = vsel %vm1004, %v1001, -inf
    %v1006 = vmax.f32 %v1000, %v1005
    %v1007 = vrot.slane %v1006, 4
    %v1008 = vmax.f32 %v1006, %v1007
    %v1009 = vrot.slane %v1008, 2
    %v1010 = vmax.f32 %v1008, %v1009
    %v1011 = vrot.slane %v1010, 1
    %v1012 = vmax.f32 %v1010, %v1011
    %v1013 = vsel %vm1004, %v1003, -inf
    %v1014 = vmax.f32 %v1002, %v1013
    %v1015 = vrot.slane %v1014, 4
    %v1016 = vmax.f32 %v1014, %v1015
    %v1017 = vrot.slane %v1016, 2
    %v1018 = vmax.f32 %v1016, %v1017
    %v1019 = vrot.slane %v1018, 1
    %v1020 = vmax.f32 %v1018, %v1019
    %v1021 = vld [vmem:[%s2] sm:$0x1]
    %v1023 = vperm.slane %v1021, 0
    %v1025 = vadd.f32 %v1012, %v1023
    %v1026 = vadd.f32 %v1020, %v1023
    %v1027 = vmax.f32 %v1025, 0.0
    %v1028 = vmax.f32 %v1026, 0.0
    %v1031 = vrot.slane %v1028, 7
    %v1032 = vsel %vm59, %v1031, %v1027
    %1034 = vst [vmem:[#allocation5] sm:$0x3] %v1032
    // Predicated region
    $region18: #{tpu_custom_call.1} parent=1 // pred_check
      _
    $region19: #{tpu_custom_call.1} parent=1 // pred_check_branch
      %1036 = sbr.rel (0) target = $region21
    $region20: #{tpu_custom_call.1} parent=1 // pred_region
      %1038 = vsyncadd [#allocation4], 0
      %s1040 = sshll.u32 [#allocation5], 4
      %s1041 = int_to_ptr.vmem [resolvable:$true] %s1040
      %s1042 = sshll.u32 %s3, 4
      %s1043 = int_to_ptr.hbm [resolvable:$true] %s1042
      %1045 = dma.vmem_to_hbm [thread:$0]  %s1041, 32, %s1043, [#allocation4]
    $region21: #{tpu_custom_call.1} parent=1 // pred_fallthru
      _
    // Predicated region
    $region22: #{tpu_custom_call.1} parent=1 // pred_check
      _
    $region23: #{tpu_custom_call.1} parent=1 // pred_check_branch
      %1047 = sbr.rel (0) target = $region25
    $region24: #{tpu_custom_call.1} parent=1 // pred_region
      %1049 = dma.done [#allocation4], 32
    $region25: #{tpu_custom_call.1} parent=1 // pred_fallthru
      _
    %1050 = vsyncpa [#allocation3], 1
    %1051 = vsyncpa [#allocation4], 1

</llo_original>
